<compile_context>
chip_gen: v5e
topology: v5e:2x2
jax: 0.10.0
libtpu: 0.0.40
codegen_flags: <defaults>
</compile_context>

<pallas_src>
import functools

import jax
import jax.numpy as jnp
from jax.experimental import pallas as pl
from jax.experimental.pallas import tpu as pltpu

_LANE = 128
_SUBLANE = 8


def _isnet_partial_sums_kernel(p0_ref, p1_ref, g_ref, out_ref, *, w_real):
    """Consumes one (TB, H, Wp) block of each input per step; accumulates 7 dense (8, Wp)
    sublane-partial sums into the resident (1, 64, Wp) output block."""
    step = pl.program_id(1)

    @pl.when(step == 0)
    def _init():
        out_ref[...] = jnp.zeros_like(out_ref)

    tb, h, wp = g_ref.shape
    nsub, rem = divmod(h, _SUBLANE)
    pad_lanes = wp != w_real

    # Hoisted once per grid step (JAX does not CSE broadcast_in_dim).
    row = jax.lax.broadcasted_iota(jnp.int32, (h, wp), 0)
    col = jax.lax.broadcasted_iota(jnp.int32, (h, wp), 1)
    lane_mask = (col < w_real).astype(jnp.float32) if pad_lanes else None

    def fold8(t):
        # (h, wp) f32 -> (8, wp) sublane partials: splitting the sublane axis into
        # (nsub, 8) and summing axis 0 is elementwise vreg adds (VALU only, no XLU).
        t_main = t if rem == 0 else t[:nsub * _SUBLANE]
        if nsub:
            out = t_main.reshape(nsub, _SUBLANE, wp).sum(axis=0)
        else:
            out = jnp.zeros((_SUBLANE, wp), jnp.float32)
        if rem:
            # h % 8 != 0: fold the remaining rows separately (zero rows added to the
            # partial do not change any sum; the gradient was already computed on real h).
            out = out + jnp.pad(t[nsub * _SUBLANE:], ((0, _SUBLANE - rem), (0, 0)))
        return out

    def process_plane(j):
        p0 = p0_ref[j].astype(jnp.float32)   # preds[0] probabilities (bf16 stream)
        p1 = p1_ref[j].astype(jnp.float32)   # preds[1] probabilities (f32 stream, BCE input)
        g = g_ref[j].astype(jnp.float32)     # gt mask (binary, bf16 stream -> exact)

        # --- Get_gradient_nopadding on gt (edge_gt) ---
        d_v = pltpu.roll(g, h - 1, 0) - pltpu.roll(g, 1, 0)
        d_h = pltpu.roll(g, wp - 1, 1) - pltpu.roll(g, 1, 1)
        gv = jnp.where(row == 0, g[1:2, :],
                       jnp.where(row == h - 1, g[h - 2:h - 1, :], d_v))
        gh = jnp.where(col == 0, g[:, 1:2],
                       jnp.where(col == w_real - 1, g[:, w_real - 2:w_real - 1], d_h))
        edge = jnp.sqrt(gv * gv + gh * gh + 1e-6)

        # --- elementwise terms (4 EUP ops / element: tanh, 2x log, sqrt) ---
        sp1 = 0.5 * jnp.tanh(0.5 * p1) + 0.5               # == sigmoid, single EUP op
        log_p = jnp.maximum(jnp.log(p1), -100.0)            # PyTorch BCELoss clamp
        log_1mp = jnp.maximum(jnp.log(1.0 - p1), -100.0)
        bce = -(edge * log_p + (1.0 - edge) * log_1mp)

        if pad_lanes:
            # Mask only the quantities the padded lanes would pollute
            # (sigmoid(0)=0.5, edge~sqrt(1e-6), clamped logs).
            edge_s, sp1_s, bce_s = edge * lane_mask, sp1 * lane_mask, bce * lane_mask
        else:
            edge_s, sp1_s, bce_s = edge, sp1, bce

        def accum(q, term):
            # Full (8,128)-dense read-modify-write; no 1-sublane masked vst.
            out_ref[0, _SUBLANE * q:_SUBLANE * (q + 1), :] += fold8(term)

        accum(0, p0 * g)        # intersection(preds[0], gt)      (gt padded lanes are 0)
        accum(1, p0)            # sum preds[0]                    (padded lanes are 0)
        accum(2, g)             # sum gt
        accum(3, bce_s)         # BCE(preds[1], edge_gt) numerator
        accum(4, sp1_s * edge)  # intersection(sigmoid(preds[1]), edge_gt)
        accum(5, sp1_s)         # sum sigmoid(preds[1])
        accum(6, edge_s)        # sum edge_gt
        # sublanes [56, 64) exist only for alignment: zero-initialized, never written.

    if tb == 1:
        process_plane(0)
    else:
        # One plane at a time keeps full-plane f32 intermediates bounded at one plane
        # while the DMA block still carries TB planes per step.
        def body(j, carry):
            process_plane(j)
            return carry
        jax.lax.fori_loop(0, tb, body, 0)


def isnet_loss(preds, gt_masks):
    """JAX/Pallas equivalent of ISNetLoss.forward(preds, gt_masks). Inputs are NCHW."""
    pred0, pred1 = preds[0], preds[1]
    b, c, h, w = gt_masks.shape
    assert h >= 2 and w >= 2, "gradient stencil needs H, W >= 2"
    n = b * c
    wp = max(_LANE, ((w + _LANE - 1) // _LANE) * _LANE)

    def prep(x, dtype):
        x = x.reshape(n, h, w).astype(dtype)
        if wp != w:
            x = jnp.pad(x, ((0, 0), (0, 0), (0, wp - w)))
        return x

    # p0 (used linearly) and gt (binary) stream as bf16; p1 stays f32 for BCE fidelity.
    p0 = prep(pred0, jnp.bfloat16)
    p1 = prep(pred1, jnp.float32)
    g = prep(gt_masks, jnp.bfloat16)

    # Two independent partial-sum blocks so v7x's two TensorCores can each own one.
    num_parts = 2 if (n >= 2 and n % 2 == 0) else 1
    # TODO(synk): make the 2-way split unconditional (cdiv + masked tail planes) and mark the
    # part axis pltpu.CORE_PARALLEL once verified to shard across v7x TensorCores.
    n_per = n // num_parts

    # Batch TB planes per grid step (amortize ~0.35us/step overhead, larger DMAs),
    # keeping the streamed input block around ~4 MiB per buffer.
    plane_in_bytes = h * wp * (2 + 4 + 2)       # bf16 + f32 + bf16 per plane
    tb_cap = max(1, (4 << 20) // plane_in_bytes)
    tb = 1
    for d in range(1, n_per + 1):
        if n_per % d == 0 and d <= tb_cap:
            tb = d
    steps = n_per // tb
    grid = (num_parts, steps)

    in_spec = pl.BlockSpec((tb, h, wp), lambda part, i: (part * steps + i, 0, 0))
    out_spec = pl.BlockSpec((1, 64, wp), lambda part, i: (part, 0, 0))

    # VMEM budget: double-buffered input blocks + ~12 per-plane f32 intermediates +
    # resident accumulator + slack.  Capped at 48 MiB so it also fits v7x's 64 MiB VMEM.
    vmem_need = 2 * tb * plane_in_bytes + 12 * h * wp * 4 + 2 * 64 * wp * 4 + (2 << 20)
    vmem_limit = int(min(max(vmem_need, 32 << 20), 48 << 20))
    # TODO(synk): for very tall planes also chunk the elementwise body over H (2-row halo
    # for the vertical gradient) so the per-plane intermediates stay bounded too.

    partials = pl.pallas_call(
        functools.partial(_isnet_partial_sums_kernel, w_real=w),
        grid=grid,
        in_specs=[in_spec, in_spec, in_spec],
        out_specs=out_spec,
        out_shape=jax.ShapeDtypeStruct((num_parts, 64, wp), jnp.float32),
        compiler_params=pltpu.CompilerParams(
            dimension_semantics=("parallel", "arbitrary"),
            vmem_limit_bytes=vmem_limit,
        ),
    )(p0, p1, g)

    # Tiny final reduce + scalar ratio arithmetic in plain XLA.
    sums = jnp.sum(partials.reshape(num_parts, 8, 8, wp), axis=(0, 2, 3))
    inter0, s_p0, s_g = sums[0], sums[1], sums[2]
    bce_sum = sums[3]
    inter1, s_sp1, s_edge = sums[4], sums[5], sums[6]

    smooth = 1.0
    loss_img = 1.0 - (inter0 + smooth) / (s_p0 + s_g - inter0 + smooth)
    numel = jnp.float32(n * h * w)
    loss_edge = 10.0 * (bce_sum / numel) + (
        1.0 - (inter1 + smooth) / (s_sp1 + s_edge - inter1 + smooth))
    return loss_img + loss_edge


def _reference_loss(pred0, pred1, gt_masks):
    """Pure-JAX reference of ISNetLoss.forward (f32, NCHW) for a sanity check."""
    def edge_map(x):
        xp = jnp.pad(x, ((0, 0), (0, 0), (1, 1), (1, 1)))
        gv = xp[:, :, 2:, 1:-1] - xp[:, :, :-2, 1:-1]
        gh = xp[:, :, 1:-1, 2:] - xp[:, :, 1:-1, :-2]
        return jnp.sqrt(gv * gv + gh * gh + 1e-6)

    def soft_iou(pred, gt):
        inter = jnp.sum(pred * gt)
        return 1.0 - (inter + 1.0) / (jnp.sum(pred) + jnp.sum(gt) - inter + 1.0)

    edge_gt = edge_map(gt_masks)
    bce = jnp.mean(-(edge_gt * jnp.maximum(jnp.log(pred1), -100.0)
                     + (1.0 - edge_gt) * jnp.maximum(jnp.log(1.0 - pred1), -100.0)))
    return soft_iou(pred0, gt_masks) + 10.0 * bce + soft_iou(jax.nn.sigmoid(pred1), edge_gt)


if __name__ == "__main__":
    B, C, H, W = 2, 1, 16, 16
    key = jax.random.PRNGKey(0)
    k1, k2, k3 = jax.random.split(key, 3)

    # Binary gt masks; network outputs in (0, 1) (sigmoid of noise), as ISNet feeds BCELoss.
    gt_masks = (jax.random.uniform(k1, (B, C, H, W)) > 0.7).astype(jnp.float32)
    pred0 = jax.nn.sigmoid(jax.random.normal(k2, (B, C, H, W), dtype=jnp.float32))
    pred1 = jax.nn.sigmoid(jax.random.normal(k3, (B, C, H, W), dtype=jnp.float32))

    loss = jax.jit(isnet_loss)((pred0, pred1), gt_masks)
    loss = jax.block_until_ready(loss)

    # Reference evaluated on the same streamed precision: p0/gt rounded to bf16, p1 kept f32.
    rnd = lambda x: x.astype(jnp.bfloat16).astype(jnp.float32)
    ref = float(_reference_loss(rnd(pred0), pred1, rnd(gt_masks)))
    val = float(loss)
    assert jnp.isfinite(loss), val
    assert abs(val - ref) <= 1e-2 * (1.0 + abs(ref)), (val, ref)

    print("KERNEL_OK")
</pallas_src>

<mosaic_0001>
module attributes {stable_mosaic.version = 11 : i64} {
  func.func @_isnet_partial_sums_kernel(%arg0: i32, %arg1: i32, %arg2: memref<1x16x128xbf16, #tpu.memory_space<vmem>>, %arg3: memref<1x16x128xf32, #tpu.memory_space<vmem>>, %arg4: memref<1x16x128xbf16, #tpu.memory_space<vmem>>, %arg5: memref<1x64x128xf32, #tpu.memory_space<vmem>>) attributes {dimension_semantics = [#tpu.dimension_semantics<parallel>, #tpu.dimension_semantics<arbitrary>], iteration_bounds = array<i64: 2, 1>, scalar_prefetch = 0 : i64, scratch_operands = 0 : i64, tpu.core_type = #tpu.core_type<tc>, window_params = [{transform_indices = @transform_0, window_bounds = array<i64: 1, 16, 128>}, {transform_indices = @transform_1, window_bounds = array<i64: 1, 16, 128>}, {transform_indices = @transform_2, window_bounds = array<i64: 1, 16, 128>}, {transform_indices = @transform_3, window_bounds = array<i64: 1, 64, 128>}]} {
    %c0_i32 = arith.constant 0 : i32
    %0 = arith.cmpi eq, %arg1, %c0_i32 : i32
    %1 = arith.extui %0 : i1 to i32
    %c0_i32_0 = arith.constant 0 : i32
    %2 = arith.cmpi ne, %1, %c0_i32_0 : i32
    scf.if %2 {
      %cst_65 = arith.constant 0.000000e+00 : f32
      %136 = vector.broadcast %cst_65 : f32 to vector<1x64x128xf32>
      %c0_66 = arith.constant 0 : index
      %c0_67 = arith.constant 0 : index
      %c0_68 = arith.constant 0 : index
      %137 = vector.load %arg5[%c0_66, %c0_67, %c0_68] : memref<1x64x128xf32, #tpu.memory_space<vmem>>, vector<1x64x128xf32>
      tpu.vector_store %arg5[%c0_66, %c0_67, %c0_68], %136 {strides = array<i32>} : memref<1x64x128xf32, #tpu.memory_space<vmem>>, vector<1x64x128xf32>,
    } else {
    }
    %3 = tpu.iota {dimensions = array<i32: 0>} : vector<16x128xi32>
    %4 = tpu.iota {dimensions = array<i32: 1>} : vector<16x128xi32>
    %c16_i32 = arith.constant 16 : i32
    %5 = vector.broadcast %c16_i32 : i32 to vector<16x128xi32>
    %6 = arith.cmpi slt, %4, %5 : vector<16x128xi32>
    %7 = arith.extui %6 : vector<16x128xi1> to vector<16x128xi32>
    %8 = arith.sitofp %7 : vector<16x128xi32> to vector<16x128xf32>
    %c0 = arith.constant 0 : index
    %c0_1 = arith.constant 0 : index
    %c0_2 = arith.constant 0 : index
    %9 = vector.load %arg2[%c0, %c0_1, %c0_2] : memref<1x16x128xbf16, #tpu.memory_space<vmem>>, vector<1x16x128xbf16>
    %10 = vector.shape_cast %9 : vector<1x16x128xbf16> to vector<16x128xbf16>
    %11 = arith.extf %10 : vector<16x128xbf16> to vector<16x128xf32>
    %c0_3 = arith.constant 0 : index
    %c0_4 = arith.constant 0 : index
    %c0_5 = arith.constant 0 : index
    %12 = vector.load %arg3[%c0_3, %c0_4, %c0_5] : memref<1x16x128xf32, #tpu.memory_space<vmem>>, vector<1x16x128xf32>
    %13 = vector.shape_cast %12 : vector<1x16x128xf32> to vector<16x128xf32>
    %c0_6 = arith.constant 0 : index
    %c0_7 = arith.constant 0 : index
    %c0_8 = arith.constant 0 : index
    %14 = vector.load %arg4[%c0_6, %c0_7, %c0_8] : memref<1x16x128xbf16, #tpu.memory_space<vmem>>, vector<1x16x128xbf16>
    %15 = vector.shape_cast %14 : vector<1x16x128xbf16> to vector<16x128xbf16>
    %16 = arith.extf %15 : vector<16x128xbf16> to vector<16x128xf32>
    %c15_i32 = arith.constant 15 : i32
    %17 = tpu.dynamic_rotate %16 by %c15_i32 dim 0 : vector<16x128xf32>, i32 -> vector<16x128xf32>
    %c1_i32 = arith.constant 1 : i32
    %18 = tpu.dynamic_rotate %16 by %c1_i32 dim 0 : vector<16x128xf32>, i32 -> vector<16x128xf32>
    %19 = arith.subf %17, %18 : vector<16x128xf32>
    %c127_i32 = arith.constant 127 : i32
    %20 = tpu.dynamic_rotate %16 by %c127_i32 dim 1 : vector<16x128xf32>, i32 -> vector<16x128xf32>
    %c1_i32_9 = arith.constant 1 : i32
    %21 = tpu.dynamic_rotate %16 by %c1_i32_9 dim 1 : vector<16x128xf32>, i32 -> vector<16x128xf32>
    %22 = arith.subf %20, %21 : vector<16x128xf32>
    %c0_i32_10 = arith.constant 0 : i32
    %23 = vector.broadcast %c0_i32_10 : i32 to vector<16x128xi32>
    %24 = arith.cmpi eq, %3, %23 : vector<16x128xi32>
    %25 = vector.extract_strided_slice %16 {offsets = [1, 0], sizes = [1, 128], strides = [1, 1]} : vector<16x128xf32> to vector<1x128xf32>
    %c15_i32_11 = arith.constant 15 : i32
    %26 = vector.broadcast %c15_i32_11 : i32 to vector<16x128xi32>
    %27 = arith.cmpi eq, %3, %26 : vector<16x128xi32>
    %28 = vector.extract_strided_slice %16 {offsets = [14, 0], sizes = [1, 128], strides = [1, 1]} : vector<16x128xf32> to vector<1x128xf32>
    %29 = vector.shape_cast %28 : vector<1x128xf32> to vector<1x128xf32>
    %30 = vector.broadcast %29 : vector<1x128xf32> to vector<16x128xf32>
    %31 = arith.select %27, %30, %19 : vector<16x128xi1>, vector<16x128xf32>
    %32 = vector.shape_cast %25 : vector<1x128xf32> to vector<1x128xf32>
    %33 = vector.broadcast %32 : vector<1x128xf32> to vector<16x128xf32>
    %34 = arith.select %24, %33, %31 : vector<16x128xi1>, vector<16x128xf32>
    %c0_i32_12 = arith.constant 0 : i32
    %35 = vector.broadcast %c0_i32_12 : i32 to vector<16x128xi32>
    %36 = arith.cmpi eq, %4, %35 : vector<16x128xi32>
    %37 = vector.extract_strided_slice %16 {offsets = [0, 1], sizes = [16, 1], strides = [1, 1]} : vector<16x128xf32> to vector<16x1xf32>
    %c15_i32_13 = arith.constant 15 : i32
    %38 = vector.broadcast %c15_i32_13 : i32 to vector<16x128xi32>
    %39 = arith.cmpi eq, %4, %38 : vector<16x128xi32>
    %40 = vector.extract_strided_slice %16 {offsets = [0, 14], sizes = [16, 1], strides = [1, 1]} : vector<16x128xf32> to vector<16x1xf32>
    %41 = vector.shape_cast %40 : vector<16x1xf32> to vector<16x1xf32>
    %42 = vector.broadcast %41 : vector<16x1xf32> to vector<16x128xf32>
    %43 = arith.select %39, %42, %22 : vector<16x128xi1>, vector<16x128xf32>
    %44 = vector.shape_cast %37 : vector<16x1xf32> to vector<16x1xf32>
    %45 = vector.broadcast %44 : vector<16x1xf32> to vector<16x128xf32>
    %46 = arith.select %36, %45, %43 : vector<16x128xi1>, vector<16x128xf32>
    %47 = arith.mulf %34, %34 : vector<16x128xf32>
    %48 = arith.mulf %46, %46 : vector<16x128xf32>
    %49 = arith.addf %47, %48 : vector<16x128xf32>
    %cst = arith.constant 9.99999997E-7 : f32
    %50 = vector.broadcast %cst : f32 to vector<16x128xf32>
    %51 = arith.addf %49, %50 : vector<16x128xf32>
    %52 = math.sqrt %51 : vector<16x128xf32>
    %cst_14 = arith.constant 5.000000e-01 : f32
    %53 = vector.broadcast %cst_14 : f32 to vector<16x128xf32>
    %54 = arith.mulf %53, %13 : vector<16x128xf32>
    %55 = math.tanh %54 : vector<16x128xf32>
    %cst_15 = arith.constant 5.000000e-01 : f32
    %56 = vector.broadcast %cst_15 : f32 to vector<16x128xf32>
    %57 = arith.mulf %56, %55 : vector<16x128xf32>
    %cst_16 = arith.constant 5.000000e-01 : f32
    %58 = vector.broadcast %cst_16 : f32 to vector<16x128xf32>
    %59 = arith.addf %57, %58 : vector<16x128xf32>
    %60 = math.log %13 : vector<16x128xf32>
    %cst_17 = arith.constant -1.000000e+02 : f32
    %61 = vector.broadcast %cst_17 : f32 to vector<16x128xf32>
    %62 = arith.maximumf %60, %61 : vector<16x128xf32>
    %cst_18 = arith.constant 1.000000e+00 : f32
    %63 = vector.broadcast %cst_18 : f32 to vector<16x128xf32>
    %64 = arith.subf %63, %13 : vector<16x128xf32>
    %65 = math.log %64 : vector<16x128xf32>
    %cst_19 = arith.constant -1.000000e+02 : f32
    %66 = vector.broadcast %cst_19 : f32 to vector<16x128xf32>
    %67 = arith.maximumf %65, %66 : vector<16x128xf32>
    %68 = arith.mulf %52, %62 : vector<16x128xf32>
    %cst_20 = arith.constant 1.000000e+00 : f32
    %69 = vector.broadcast %cst_20 : f32 to vector<16x128xf32>
    %70 = arith.subf %69, %52 : vector<16x128xf32>
    %71 = arith.mulf %70, %67 : vector<16x128xf32>
    %72 = arith.addf %68, %71 : vector<16x128xf32>
    %cst_21 = arith.constant 0.000000e+00 : f32
    %73 = vector.broadcast %cst_21 : f32 to vector<16x128xf32>
    %74 = arith.subf %73, %72 : vector<16x128xf32>
    %75 = arith.mulf %52, %8 : vector<16x128xf32>
    %76 = arith.mulf %59, %8 : vector<16x128xf32>
    %77 = arith.mulf %74, %8 : vector<16x128xf32>
    %78 = arith.mulf %11, %16 : vector<16x128xf32>
    %c0_22 = arith.constant 0 : index
    %c0_23 = arith.constant 0 : index
    %c0_24 = arith.constant 0 : index
    %79 = vector.load %arg5[%c0_22, %c0_23, %c0_24] : memref<1x64x128xf32, #tpu.memory_space<vmem>>, vector<1x8x128xf32>
    %80 = vector.shape_cast %79 : vector<1x8x128xf32> to vector<8x128xf32>
    %81 = vector.shape_cast %78 : vector<16x128xf32> to vector<2x8x128xf32>
    %cst_25 = arith.constant dense<0.000000e+00> : vector<8x128xf32>
    %82 = vector.multi_reduction <add>, %81, %cst_25 [0] : vector<2x8x128xf32> to vector<8x128xf32>
    %83 = arith.addf %80, %82 : vector<8x128xf32>
    %c0_26 = arith.constant 0 : index
    %c0_27 = arith.constant 0 : index
    %c0_28 = arith.constant 0 : index
    %84 = vector.load %arg5[%c0_26, %c0_27, %c0_28] : memref<1x64x128xf32, #tpu.memory_space<vmem>>, vector<1x8x128xf32>
    %85 = vector.shape_cast %84 : vector<1x8x128xf32> to vector<8x128xf32>
    %86 = vector.shape_cast %83 : vector<8x128xf32> to vector<1x8x128xf32>
    tpu.vector_store %arg5[%c0_26, %c0_27, %c0_28], %86 {strides = array<i32>} : memref<1x64x128xf32, #tpu.memory_space<vmem>>, vector<1x8x128xf32>,
    %c0_29 = arith.constant 0 : index
    %c8 = arith.constant 8 : index
    %c0_30 = arith.constant 0 : index
    %87 = vector.load %arg5[%c0_29, %c8, %c0_30] : memref<1x64x128xf32, #tpu.memory_space<vmem>>, vector<1x8x128xf32>
    %88 = vector.shape_cast %87 : vector<1x8x128xf32> to vector<8x128xf32>
    %89 = vector.shape_cast %11 : vector<16x128xf32> to vector<2x8x128xf32>
    %cst_31 = arith.constant dense<0.000000e+00> : vector<8x128xf32>
    %90 = vector.multi_reduction <add>, %89, %cst_31 [0] : vector<2x8x128xf32> to vector<8x128xf32>
    %91 = arith.addf %88, %90 : vector<8x128xf32>
    %c0_32 = arith.constant 0 : index
    %c8_33 = arith.constant 8 : index
    %c0_34 = arith.constant 0 : index
    %92 = vector.load %arg5[%c0_32, %c8_33, %c0_34] : memref<1x64x128xf32, #tpu.memory_space<vmem>>, vector<1x8x128xf32>
    %93 = vector.shape_cast %92 : vector<1x8x128xf32> to vector<8x128xf32>
    %94 = vector.shape_cast %91 : vector<8x128xf32> to vector<1x8x128xf32>
    tpu.vector_store %arg5[%c0_32, %c8_33, %c0_34], %94 {strides = array<i32>} : memref<1x64x128xf32, #tpu.memory_space<vmem>>, vector<1x8x128xf32>,
    %c0_35 = arith.constant 0 : index
    %c16 = arith.constant 16 : index
    %c0_36 = arith.constant 0 : index
    %95 = vector.load %arg5[%c0_35, %c16, %c0_36] : memref<1x64x128xf32, #tpu.memory_space<vmem>>, vector<1x8x128xf32>
    %96 = vector.shape_cast %95 : vector<1x8x128xf32> to vector<8x128xf32>
    %97 = vector.shape_cast %16 : vector<16x128xf32> to vector<2x8x128xf32>
    %cst_37 = arith.constant dense<0.000000e+00> : vector<8x128xf32>
    %98 = vector.multi_reduction <add>, %97, %cst_37 [0] : vector<2x8x128xf32> to vector<8x128xf32>
    %99 = arith.addf %96, %98 : vector<8x128xf32>
    %c0_38 = arith.constant 0 : index
    %c16_39 = arith.constant 16 : index
    %c0_40 = arith.constant 0 : index
    %100 = vector.load %arg5[%c0_38, %c16_39, %c0_40] : memref<1x64x128xf32, #tpu.memory_space<vmem>>, vector<1x8x128xf32>
    %101 = vector.shape_cast %100 : vector<1x8x128xf32> to vector<8x128xf32>
    %102 = vector.shape_cast %99 : vector<8x128xf32> to vector<1x8x128xf32>
    tpu.vector_store %arg5[%c0_38, %c16_39, %c0_40], %102 {strides = array<i32>} : memref<1x64x128xf32, #tpu.memory_space<vmem>>, vector<1x8x128xf32>,
    %c0_41 = arith.constant 0 : index
    %c24 = arith.constant 24 : index
    %c0_42 = arith.constant 0 : index
    %103 = vector.load %arg5[%c0_41, %c24, %c0_42] : memref<1x64x128xf32, #tpu.memory_space<vmem>>, vector<1x8x128xf32>
    %104 = vector.shape_cast %103 : vector<1x8x128xf32> to vector<8x128xf32>
    %105 = vector.shape_cast %77 : vector<16x128xf32> to vector<2x8x128xf32>
    %cst_43 = arith.constant dense<0.000000e+00> : vector<8x128xf32>
    %106 = vector.multi_reduction <add>, %105, %cst_43 [0] : vector<2x8x128xf32> to vector<8x128xf32>
    %107 = arith.addf %104, %106 : vector<8x128xf32>
    %c0_44 = arith.constant 0 : index
    %c24_45 = arith.constant 24 : index
    %c0_46 = arith.constant 0 : index
    %108 = vector.load %arg5[%c0_44, %c24_45, %c0_46] : memref<1x64x128xf32, #tpu.memory_space<vmem>>, vector<1x8x128xf32>
    %109 = vector.shape_cast %108 : vector<1x8x128xf32> to vector<8x128xf32>
    %110 = vector.shape_cast %107 : vector<8x128xf32> to vector<1x8x128xf32>
    tpu.vector_store %arg5[%c0_44, %c24_45, %c0_46], %110 {strides = array<i32>} : memref<1x64x128xf32, #tpu.memory_space<vmem>>, vector<1x8x128xf32>,
    %111 = arith.mulf %76, %52 : vector<16x128xf32>
    %c0_47 = arith.constant 0 : index
    %c32 = arith.constant 32 : index
    %c0_48 = arith.constant 0 : index
    %112 = vector.load %arg5[%c0_47, %c32, %c0_48] : memref<1x64x128xf32, #tpu.memory_space<vmem>>, vector<1x8x128xf32>
    %113 = vector.shape_cast %112 : vector<1x8x128xf32> to vector<8x128xf32>
    %114 = vector.shape_cast %111 : vector<16x128xf32> to vector<2x8x128xf32>
    %cst_49 = arith.constant dense<0.000000e+00> : vector<8x128xf32>
    %115 = vector.multi_reduction <add>, %114, %cst_49 [0] : vector<2x8x128xf32> to vector<8x128xf32>
    %116 = arith.addf %113, %115 : vector<8x128xf32>
    %c0_50 = arith.constant 0 : index
    %c32_51 = arith.constant 32 : index
    %c0_52 = arith.constant 0 : index
    %117 = vector.load %arg5[%c0_50, %c32_51, %c0_52] : memref<1x64x128xf32, #tpu.memory_space<vmem>>, vector<1x8x128xf32>
    %118 = vector.shape_cast %117 : vector<1x8x128xf32> to vector<8x128xf32>
    %119 = vector.shape_cast %116 : vector<8x128xf32> to vector<1x8x128xf32>
    tpu.vector_store %arg5[%c0_50, %c32_51, %c0_52], %119 {strides = array<i32>} : memref<1x64x128xf32, #tpu.memory_space<vmem>>, vector<1x8x128xf32>,
    %c0_53 = arith.constant 0 : index
    %c40 = arith.constant 40 : index
    %c0_54 = arith.constant 0 : index
    %120 = vector.load %arg5[%c0_53, %c40, %c0_54] : memref<1x64x128xf32, #tpu.memory_space<vmem>>, vector<1x8x128xf32>
    %121 = vector.shape_cast %120 : vector<1x8x128xf32> to vector<8x128xf32>
    %122 = vector.shape_cast %76 : vector<16x128xf32> to vector<2x8x128xf32>
    %cst_55 = arith.constant dense<0.000000e+00> : vector<8x128xf32>
    %123 = vector.multi_reduction <add>, %122, %cst_55 [0] : vector<2x8x128xf32> to vector<8x128xf32>
    %124 = arith.addf %121, %123 : vector<8x128xf32>
    %c0_56 = arith.constant 0 : index
    %c40_57 = arith.constant 40 : index
    %c0_58 = arith.constant 0 : index
    %125 = vector.load %arg5[%c0_56, %c40_57, %c0_58] : memref<1x64x128xf32, #tpu.memory_space<vmem>>, vector<1x8x128xf32>
    %126 = vector.shape_cast %125 : vector<1x8x128xf32> to vector<8x128xf32>
    %127 = vector.shape_cast %124 : vector<8x128xf32> to vector<1x8x128xf32>
    tpu.vector_store %arg5[%c0_56, %c40_57, %c0_58], %127 {strides = array<i32>} : memref<1x64x128xf32, #tpu.memory_space<vmem>>, vector<1x8x128xf32>,
    %c0_59 = arith.constant 0 : index
    %c48 = arith.constant 48 : index
    %c0_60 = arith.constant 0 : index
    %128 = vector.load %arg5[%c0_59, %c48, %c0_60] : memref<1x64x128xf32, #tpu.memory_space<vmem>>, vector<1x8x128xf32>
    %129 = vector.shape_cast %128 : vector<1x8x128xf32> to vector<8x128xf32>
    %130 = vector.shape_cast %75 : vector<16x128xf32> to vector<2x8x128xf32>
    %cst_61 = arith.constant dense<0.000000e+00> : vector<8x128xf32>
    %131 = vector.multi_reduction <add>, %130, %cst_61 [0] : vector<2x8x128xf32> to vector<8x128xf32>
    %132 = arith.addf %129, %131 : vector<8x128xf32>
    %c0_62 = arith.constant 0 : index
    %c48_63 = arith.constant 48 : index
    %c0_64 = arith.constant 0 : index
    %133 = vector.load %arg5[%c0_62, %c48_63, %c0_64] : memref<1x64x128xf32, #tpu.memory_space<vmem>>, vector<1x8x128xf32>
    %134 = vector.shape_cast %133 : vector<1x8x128xf32> to vector<8x128xf32>
    %135 = vector.shape_cast %132 : vector<8x128xf32> to vector<1x8x128xf32>
    tpu.vector_store %arg5[%c0_62, %c48_63, %c0_64], %135 {strides = array<i32>} : memref<1x64x128xf32, #tpu.memory_space<vmem>>, vector<1x8x128xf32>,
    return
  }
  func.func @transform_0(%arg0: i32, %arg1: i32) -> (i32, i32, i32) {
    %c1_i32 = arith.constant 1 : i32
    %0 = arith.muli %arg0, %c1_i32 : i32
    %1 = arith.addi %0, %arg1 : i32
    %c0_i32 = arith.constant 0 : i32
    %c0_i32_0 = arith.constant 0 : i32
    %c0_i32_1 = arith.constant 0 : i32
    return %1, %c0_i32, %c0_i32_0 : i32, i32, i32
  }
  func.func @transform_1(%arg0: i32, %arg1: i32) -> (i32, i32, i32) {
    %c1_i32 = arith.constant 1 : i32
    %0 = arith.muli %arg0, %c1_i32 : i32
    %1 = arith.addi %0, %arg1 : i32
    %c0_i32 = arith.constant 0 : i32
    %c0_i32_0 = arith.constant 0 : i32
    %c0_i32_1 = arith.constant 0 : i32
    return %1, %c0_i32, %c0_i32_0 : i32, i32, i32
  }
  func.func @transform_2(%arg0: i32, %arg1: i32) -> (i32, i32, i32) {
    %c1_i32 = arith.constant 1 : i32
    %0 = arith.muli %arg0, %c1_i32 : i32
    %1 = arith.addi %0, %arg1 : i32
    %c0_i32 = arith.constant 0 : i32
    %c0_i32_0 = arith.constant 0 : i32
    %c0_i32_1 = arith.constant 0 : i32
    return %1, %c0_i32, %c0_i32_0 : i32, i32, i32
  }
  func.func @transform_3(%arg0: i32, %arg1: i32) -> (i32, i32, i32) {
    %c0_i32 = arith.constant 0 : i32
    %c0_i32_0 = arith.constant 0 : i32
    %c0_i32_1 = arith.constant 0 : i32
    return %arg0, %c0_i32, %c0_i32_0 : i32, i32, i32
  }
}

</mosaic_0001>

<llo_original>
// kernel: isnet_loss.1
$region0: #{isnet_loss.1}
  #allocation0 [shape = 'u32[]', space=smem, size = 0x4, offset = 0x4, fixed_abs, tag = 'smem constant byte address 0x4 - core index']
  #allocation1 [shape = 'u32[72,128]{1,0:T(1,128)}', space=vmem, size = 0x9000, scoped, tag = 'internal scratch']
  %s0 = inlined_call_operand.vmem [shape: bf16[2,16,128], index: 0, kind: input, shape index: {}]
  %s1 = inlined_call_operand.vmem [shape: f32[2,16,128], index: 1, kind: input, shape index: {}]
  %s2 = inlined_call_operand.vmem [shape: bf16[2,16,128], index: 2, kind: input, shape index: {}]
  %s3 = inlined_call_operand.vmem [shape: f32[2,64,128], index: 3, kind: output, shape index: {}]
  %s4 = sld [smem:[#allocation0]]
  $region49: #{isnet_loss.1} parent=0
    _
  %s6 = ssub.s32 1, %s4
  %s7 = scalar_select 0, %s6, %s4
  loop: start=0, step=1, limit=4
  $region2: #{isnet_loss.1} parent=0 // loop_pre_header
    _
  $region3: #{isnet_loss.1} parent=0 // loop_header
    %s9 = sphi 0, %s13
    %p10 = scmp.ge.s32.totalorder %s9, 4
    %s16 = sphi 0, %s28
    %s17 = sphi 0, %s24
    %s18 = sphi 0, %s16
    %s19 = sphi 0, %s17
    %s20 = sphi 0, %s18
    %s21 = sphi 0, %s19
    %s33 = sphi 0, %s35
    %s36 = sphi 0, %s33
    %s37 = sphi 0, %s36
    %s53 = sphi 0, %s37
    %s61 = sphi 0, %s63
    %s64 = sphi 0, %s61
    %s65 = sphi 0, %s64
    %s81 = sphi 0, %s65
    %s89 = sphi 0, %s91
    %s92 = sphi 0, %s89
    %s93 = sphi 0, %s92
    %s109 = sphi 0, %s93
    %s115 = sphi 0, %s117
    %s118 = sphi 0, %s115
    %s119 = sphi 0, %s118
    %s135 = sphi 0, %s119
  $region4: #{isnet_loss.1} parent=0 // loop_header_branch
    %12 = sbr.rel (%p10) target = $region8
  $region5: #{isnet_loss.1} parent=0 // loop_body
    %s14 = ssub.s32 %s9, 1
    %s15 = ssub.s32 %s9, 2
    %s22 = sadd.s32 1, %s17
    %p23 = scmp.ge.s32.totalorder %s22, 1
    %s24 = scalar_select %p23, 0, %s22
    %s25 = sadd.s32 1, %s16
    %s26 = scalar_select %p23, %s25, %s16
    %p27 = scmp.ge.s32.totalorder %s26, 2
    %s28 = scalar_select %p27, 0, %s26
    %s29 = sadd.s32 %s16, %s17
    %s30 = sadd.s32 %s28, %s24
    %s31 = ssub.s32 %s29, %s30
    %p32 = scmp.eq.s32.totalorder %s31, 0
    %s34 = sadd.s32 %s33, 1
    %s35 = scalar_select %p32, %s33, %s34
    %p38 = pneg %p32
    %p39 = scmp.eq.s32.totalorder %s9, 1
    %p40 = por %p38, %p39
    %p41 = scmp.ne.s32.totalorder %s33, %s36
    %p42 = scmp.eq.s32.totalorder %s9, 0
    %p43 = por %p41, %p42
    %p44 = scmp.ne.s32.totalorder %s33, %s36
    %p45 = scmp.eq.s32.totalorder %s14, 1
    %p46 = por %p44, %p45
    %p47 = scmp.ne.s32.totalorder %s36, %s37
    %p48 = scmp.eq.s32.totalorder %s14, 0
    %p49 = por %p47, %p48
    %p50 = scmp.ne.s32.totalorder %s36, %s37
    %p51 = scmp.eq.s32.totalorder %s15, 1
    %p52 = por %p50, %p51
    %p54 = scmp.ne.s32.totalorder %s37, %s53
    %p55 = scmp.eq.s32.totalorder %s15, 0
    %p56 = por %p54, %p55
    %s57 = sadd.s32 %s16, %s17
    %s58 = sadd.s32 %s28, %s24
    %s59 = ssub.s32 %s57, %s58
    %p60 = scmp.eq.s32.totalorder %s59, 0
    %s62 = sadd.s32 %s61, 1
    %s63 = scalar_select %p60, %s61, %s62
    %p66 = pneg %p60
    %p67 = scmp.eq.s32.totalorder %s9, 1
    %p68 = por %p66, %p67
    %p69 = scmp.ne.s32.totalorder %s61, %s64
    %p70 = scmp.eq.s32.totalorder %s9, 0
    %p71 = por %p69, %p70
    %p72 = scmp.ne.s32.totalorder %s61, %s64
    %p73 = scmp.eq.s32.totalorder %s14, 1
    %p74 = por %p72, %p73
    %p75 = scmp.ne.s32.totalorder %s64, %s65
    %p76 = scmp.eq.s32.totalorder %s14, 0
    %p77 = por %p75, %p76
    %p78 = scmp.ne.s32.totalorder %s64, %s65
    %p79 = scmp.eq.s32.totalorder %s15, 1
    %p80 = por %p78, %p79
    %p82 = scmp.ne.s32.totalorder %s65, %s81
    %p83 = scmp.eq.s32.totalorder %s15, 0
    %p84 = por %p82, %p83
    %s85 = sadd.s32 %s16, %s17
    %s86 = sadd.s32 %s28, %s24
    %s87 = ssub.s32 %s85, %s86
    %p88 = scmp.eq.s32.totalorder %s87, 0
    %s90 = sadd.s32 %s89, 1
    %s91 = scalar_select %p88, %s89, %s90
    %p94 = pneg %p88
    %p95 = scmp.eq.s32.totalorder %s9, 1
    %p96 = por %p94, %p95
    %p97 = scmp.ne.s32.totalorder %s89, %s92
    %p98 = scmp.eq.s32.totalorder %s9, 0
    %p99 = por %p97, %p98
    %p100 = scmp.ne.s32.totalorder %s89, %s92
    %p101 = scmp.eq.s32.totalorder %s14, 1
    %p102 = por %p100, %p101
    %p103 = scmp.ne.s32.totalorder %s92, %s93
    %p104 = scmp.eq.s32.totalorder %s14, 0
    %p105 = por %p103, %p104
    %p106 = scmp.ne.s32.totalorder %s92, %s93
    %p107 = scmp.eq.s32.totalorder %s15, 1
    %p108 = por %p106, %p107
    %p110 = scmp.ne.s32.totalorder %s93, %s109
    %p111 = scmp.eq.s32.totalorder %s15, 0
    %p112 = por %p110, %p111
    %s113 = ssub.s32 %s16, %s28
    %p114 = scmp.eq.s32.totalorder %s113, 0
    %s116 = sadd.s32 %s115, 1
    %s117 = scalar_select %p114, %s115, %s116
    %p120 = pneg %p114
    %p121 = scmp.eq.s32.totalorder %s9, 1
    %p122 = por %p120, %p121
    %p123 = scmp.ne.s32.totalorder %s115, %s118
    %p124 = scmp.eq.s32.totalorder %s9, 0
    %p125 = por %p123, %p124
    %p126 = scmp.ne.s32.totalorder %s115, %s118
    %p127 = scmp.eq.s32.totalorder %s14, 1
    %p128 = por %p126, %p127
    %p129 = scmp.ne.s32.totalorder %s118, %s119
    %p130 = scmp.eq.s32.totalorder %s14, 0
    %p131 = por %p129, %p130
    %p132 = scmp.ne.s32.totalorder %s118, %s119
    %p133 = scmp.eq.s32.totalorder %s15, 1
    %p134 = por %p132, %p133
    %p136 = scmp.ne.s32.totalorder %s119, %s135
    %p137 = scmp.eq.s32.totalorder %s15, 0
    %p138 = por %p136, %p137
    %p139 = scmp.le.s32.totalorder 1, %s9
    %p140 = scmp.lt.s32.totalorder %s9, 3
    %p141 = pnand %p139, %p140
    %p142 = pneg %p141
    // Predicated region
    $region9: #{isnet_loss.1} parent=5 // pred_check
      _
    $region10: #{isnet_loss.1} parent=5 // pred_check_branch
      %144 = sbr.rel (%p141) target = $region12
    $region11: #{isnet_loss.1} parent=5 // pred_region
      %s145 = ssub.s32 %s9, 1
    $region12: #{isnet_loss.1} parent=5 // pred_fallthru
      _
    %p146 = scmp.lt.s32.totalorder %s9, 2
    // Predicated region
    $region13: #{isnet_loss.1} parent=5 // pred_check
      %p147 = pneg %p146
    $region14: #{isnet_loss.1} parent=5 // pred_check_branch
      %149 = sbr.rel (%p147) target = $region16
    $region15: #{isnet_loss.1} parent=5 // pred_region
      // Predicated region
      $region17: #{isnet_loss.1} parent=15 // pred_check
        %p150 = pneg %p43
      $region18: #{isnet_loss.1} parent=15 // pred_check_branch
        %152 = sbr.rel (%p150) target = $region20
      $region19: #{isnet_loss.1} parent=15 // pred_region
        %s153 = sadd.s32 %s16, %s17
        %p154 = scmp.lt.s32.totalorder %s153, 1
        %s155 = scalar_select %p154, %s153, 1
        %s156 = smul.addr %s155, 2
        %s157 = smul.addr %s156, 4
        %s158 = scalar_lea.vmem %s0, %s157
        %s159 = sadd.s32 %s16, %s17
      $region20: #{isnet_loss.1} parent=15 // pred_fallthru
        _
      // Predicated region
      $region21: #{isnet_loss.1} parent=15 // pred_check
        %p160 = pneg %p71
      $region22: #{isnet_loss.1} parent=15 // pred_check_branch
        %162 = sbr.rel (%p160) target = $region24
      $region23: #{isnet_loss.1} parent=15 // pred_region
        %s163 = sadd.s32 %s16, %s17
        %p164 = scmp.lt.s32.totalorder %s163, 1
        %s165 = scalar_select %p164, %s163, 1
        %s166 = smul.addr %s165, 2
        %s167 = smul.addr %s166, 8
        %s168 = scalar_lea.vmem %s1, %s167
        %s169 = sadd.s32 %s16, %s17
      $region24: #{isnet_loss.1} parent=15 // pred_fallthru
        _
      // Predicated region
      $region25: #{isnet_loss.1} parent=15 // pred_check
        %p170 = pneg %p99
      $region26: #{isnet_loss.1} parent=15 // pred_check_branch
        %172 = sbr.rel (%p170) target = $region28
      $region27: #{isnet_loss.1} parent=15 // pred_region
        %s173 = sadd.s32 %s16, %s17
        %p174 = scmp.lt.s32.totalorder %s173, 1
        %s175 = scalar_select %p174, %s173, 1
        %s176 = smul.addr %s175, 2
        %s177 = smul.addr %s176, 4
        %s178 = scalar_lea.vmem %s2, %s177
        %s179 = sadd.s32 %s16, %s17
      $region28: #{isnet_loss.1} parent=15 // pred_fallthru
        _
    $region16: #{isnet_loss.1} parent=5 // pred_fallthru
      _
    %p180 = scmp.le.s32.totalorder 1, %s9
    %p181 = scmp.lt.s32.totalorder %s9, 3
    %p182 = pnand %p180, %p181
    %p183 = pneg %p182
    // Predicated region
    $region29: #{isnet_loss.1} parent=5 // pred_check
      _
    $region30: #{isnet_loss.1} parent=5 // pred_check_branch
      %185 = sbr.rel (%p182) target = $region32
    $region31: #{isnet_loss.1} parent=5 // pred_region
      %s186 = ssub.s32 %s9, 1
      %s187 = sadd.s32 %s18, %s19
      %p188 = scmp.lt.s32.totalorder %s187, 1
      %s189 = scalar_select %p188, %s187, 1
      %s190 = smul.addr %s189, 2
      %s191 = smul.addr %s190, 4
      %s192 = scalar_lea.vmem %s0, %s191
      %p193 = pneg %p49
      %p194 = pneg %p46
      %s195 = sadd.s32 %s18, %s19
      %p196 = scmp.lt.s32.totalorder %s195, 1
      %s197 = scalar_select %p196, %s195, 1
      %s198 = smul.addr %s197, 2
      %s199 = smul.addr %s198, 8
      %s200 = scalar_lea.vmem %s1, %s199
      %p201 = pneg %p77
      %p202 = pneg %p74
      %s203 = sadd.s32 %s18, %s19
      %p204 = scmp.lt.s32.totalorder %s203, 1
      %s205 = scalar_select %p204, %s203, 1
      %s206 = smul.addr %s205, 2
      %s207 = smul.addr %s206, 4
      %s208 = scalar_lea.vmem %s2, %s207
      %p209 = pneg %p105
      %p210 = pneg %p102
      %p211 = pneg %p131
      %p212 = pneg %p128
      %p213 = scmp.lt.s32.totalorder %s18, 1
      %s214 = scalar_select %p213, %s18, 1
      %s215 = smul.addr %s214, 8
      %s216 = smul.addr %s215, 8
      %s217 = scalar_lea.vmem %s3, %s216
      %s218 = sadd.s32 %s18, %s19
      %p219 = scmp.lt.s32.totalorder %s218, 1
      %s220 = scalar_select %p219, %s218, 1
      %s221 = smul.addr %s220, 2
      %s222 = smul.addr %s221, 4
      %s223 = scalar_lea.vmem %s0, %s222
      %s224 = sadd.s32 %s18, %s19
      %s225 = sadd.s32 %s18, %s19
      %p226 = scmp.lt.s32.totalorder %s225, 1
      %s227 = scalar_select %p226, %s225, 1
      %s228 = smul.addr %s227, 2
      %s229 = smul.addr %s228, 8
      %s230 = scalar_lea.vmem %s1, %s229
      %s231 = sadd.s32 %s18, %s19
      %s232 = sadd.s32 %s18, %s19
      %p233 = scmp.lt.s32.totalorder %s232, 1
      %s234 = scalar_select %p233, %s232, 1
      %s235 = smul.addr %s234, 2
      %s236 = smul.addr %s235, 4
      %s237 = scalar_lea.vmem %s2, %s236
      %s238 = sadd.s32 %s18, %s19
      %p239 = scmp.lt.s32.totalorder %s18, 1
      %s240 = scalar_select %p239, %s18, 1
      %s241 = smul.addr %s240, 8
      %s242 = smul.addr %s241, 8
      %s243 = scalar_lea.vmem %s3, %s242
      %p244 = scmp.eq.s32.totalorder %s19, 0
      // Predicated region
      $region33: #{isnet_loss.1} parent=31 // pred_check
        %p245 = pneg %p244
      $region34: #{isnet_loss.1} parent=31 // pred_check_branch
        %247 = sbr.rel (%p245) target = $region36
      $region35: #{isnet_loss.1} parent=31 // pred_region
        %248 = vst [vmem:[%s243] sm:$0xff] 0.0
        %249 = vst [vmem:[%s243 + $0x8] sm:$0xff] 0.0
        %250 = vst [vmem:[%s243 + $0x10] sm:$0xff] 0.0
        %251 = vst [vmem:[%s243 + $0x18] sm:$0xff] 0.0
        %252 = vst [vmem:[%s243 + $0x20] sm:$0xff] 0.0
        %253 = vst [vmem:[%s243 + $0x28] sm:$0xff] 0.0
        %254 = vst [vmem:[%s243 + $0x30] sm:$0xff] 0.0
        %255 = vst [vmem:[%s243 + $0x38] sm:$0xff] 0.0
      $region36: #{isnet_loss.1} parent=31 // pred_fallthru
        _
      %v256 = vlaneseq
      %v257 = vshrl.u32 %v256, 7
      %v258 = vadd.s32 %v257, 8
      %v259 = vlaneseq
      %v260 = vand.u32 %v259, 127
      %vm261 = vcmp.lt.s32.totalorder %v260, 16
      %v262 = vsel %vm261, 1, 0
      %v263 = vcvt.s32.f32 %v262
      %v264 = vld [vmem:[%s223] sm:$0xf]
      %v265 = vld [vmem:[%s223 + $0x4] sm:$0xf]
      %v266 = vunpack.c.l.bf16 %v264
      %v267 = vunpack.c.l.bf16 %v265
      %v268 = vld [vmem:[%s230] sm:$0xff]
      %v269 = vld [vmem:[%s230 + $0x8] sm:$0xff]
      %v270 = vld [vmem:[%s237] sm:$0xf]
      %v271 = vld [vmem:[%s237 + $0x4] sm:$0xf]
      %v272 = vunpack.c.l.bf16 %v270
      %v273 = vunpack.c.l.bf16 %v271
      %v274 = vrot.slane %v272, 1
      %v275 = vrot.slane %v273, 1
      %vm276 = vcmp.lt.s32.totalorder %v257, 7
      %v277 = vsel %vm276, %v274, %v275
      %v278 = vsel %vm276, %v275, %v274
      %v279 = vrot.slane %v272, 7
      %v280 = vrot.slane %v273, 7
      %vm281 = vcmp.lt.s32.totalorder %v257, 1
      %v282 = vsel %vm281, %v279, %v280
      %v283 = vsel %vm281, %v280, %v279
      %v284 = vsub.f32 %v277, %v283
      %v285 = vsub.f32 %v278, %v282
      %286 = vrot.lane.b32.xlu0 %v272, 127
      %v287 = vpop.permute.xlu0 %286
      %288 = vrot.lane.b32.xlu0 %v273, 127
      %v289 = vpop.permute.xlu0 %288
      %290 = vrot.lane.b32.xlu0 %v272, 1
      %v291 = vpop.permute.xlu0 %290
      %292 = vrot.lane.b32.xlu0 %v273, 1
      %v293 = vpop.permute.xlu0 %292
      %v294 = vsub.f32 %v287, %v291
      %v295 = vsub.f32 %v289, %v293
      %vm296 = vcmp.eq.s32.totalorder %v257, 0
      %vm297 = vcmp.eq.s32.totalorder %v258, 0
      %vm298 = vcmp.eq.s32.totalorder %v257, 15
      %vm299 = vcmp.eq.s32.totalorder %v258, 15
      %v300 = vperm.slane %v273, 6
      %v301 = vsel %vm298, %v300, %v284
      %v302 = vsel %vm299, %v300, %v285
      %v303 = vperm.slane %v272, 1
      %v304 = vsel %vm296, %v303, %v301
      %v305 = vsel %vm297, %v303, %v302
      %vm306 = vcmp.eq.s32.totalorder %v260, 0
      %vm307 = vcmp.eq.s32.totalorder %v260, 15
      %309 = vset.pattern.permute.xlu0 14
      %310 = vperm.xlu0 %309, %v272
      %v311 = vpop.permute.xlu0 %310
      %314 = vset.pattern.permute.xlu0 14
      %315 = vperm.xlu0 %314, %v273
      %v316 = vpop.permute.xlu0 %315
      %v318 = vsel %vm307, %v311, %v294
      %v319 = vsel %vm307, %v316, %v295
      %320 = vset.pattern.permute.xlu0 1
      %321 = vperm.xlu0 %320, %v272
      %v322 = vpop.permute.xlu0 %321
      %324 = vset.pattern.permute.xlu0 1
      %325 = vperm.xlu0 %324, %v273
      %v326 = vpop.permute.xlu0 %325
      %v328 = vsel %vm306, %v322, %v318
      %v329 = vsel %vm306, %v326, %v319
      %v330 = vmul.f32 %v304, %v304
      %v331 = vmul.f32 %v305, %v305
      %v332 = vmul.f32 %v328, %v328
      %v333 = vmul.f32 %v329, %v329
      %v334 = vadd.f32 %v330, %v332
      %v335 = vadd.f32 %v331, %v333
      %v336 = vadd.f32 %v334, 1e-06
      %v337 = vadd.f32 %v335, 1e-06
      %v338 = vrsqrt.pop %v336
      %v339 = vmul.f32 %v338, %v336
      %v340 = vmul.f32 %v339, %v338
      %v341 = vmul.f32 0.5, %v340
      %v342 = vsub.f32 1.5, %v341
      %v343 = vmul.f32 %v338, %v342
      %v344 = vmul.f32 %v336, %v343
      %vm345 = vcmp.eq.f32.partialorder %v336, inf
      %v346 = vsel %vm345, %v336, %v344
      %vm347 = vcmp.eq.f32.partialorder %v336, 0.0
      %v348 = vand.u32 %v336, 2147483648
      %v349 = vsel %vm347, %v348, %v346
      %v350 = vrsqrt.pop %v337
      %v351 = vmul.f32 %v350, %v337
      %v352 = vmul.f32 %v351, %v350
      %v353 = vmul.f32 0.5, %v352
      %v354 = vsub.f32 1.5, %v353
      %v355 = vmul.f32 %v350, %v354
      %v356 = vmul.f32 %v337, %v355
      %vm357 = vcmp.eq.f32.partialorder %v337, inf
      %v358 = vsel %vm357, %v337, %v356
      %vm359 = vcmp.eq.f32.partialorder %v337, 0.0
      %v360 = vand.u32 %v337, 2147483648
      %v361 = vsel %vm359, %v360, %v358
      %v362 = vmul.f32 %v268, 0.5
      %v363 = vmul.f32 %v269, 0.5
      %v364 = vtanh.pop %v362
      %v365 = vtanh.pop %v363
      %v366 = vmul.f32 %v364, 0.5
      %v367 = vmul.f32 %v365, 0.5
      %v368 = vadd.f32 %v366, 0.5
      %v369 = vadd.f32 %v367, 0.5
      %v370 = vlog2.pop %v268
      %v371 = vmul.f32 %v370, 0.6931472
      %v372 = vlog2.pop %v269
      %v373 = vmul.f32 %v372, 0.6931472
      %v374 = vmax.f32 %v371, -100.0
      %v375 = vmax.f32 %v373, -100.0
      %v376 = vsub.f32 1.0, %v268
      %v377 = vsub.f32 1.0, %v269
      %v378 = vlog2.pop %v376
      %v379 = vmul.f32 %v378, 0.6931472
      %v380 = vlog2.pop %v377
      %v381 = vmul.f32 %v380, 0.6931472
      %v382 = vmax.f32 %v379, -100.0
      %v383 = vmax.f32 %v381, -100.0
      %v384 = vmul.f32 %v349, %v374
      %v385 = vmul.f32 %v361, %v375
      %v386 = vsub.f32 1.0, %v349
      %v387 = vsub.f32 1.0, %v361
      %v388 = vmul.f32 %v386, %v382
      %v389 = vmul.f32 %v387, %v383
      %v390 = vadd.f32 %v384, %v388
      %v391 = vadd.f32 %v385, %v389
      %v392 = vsub.f32 0.0, %v390
      %v393 = vsub.f32 0.0, %v391
      %v394 = vmul.f32 %v349, %v263
      %v395 = vmul.f32 %v361, %v263
      %v396 = vmul.f32 %v368, %v263
      %v397 = vmul.f32 %v369, %v263
      %v398 = vmul.f32 %v392, %v263
      %v399 = vmul.f32 %v393, %v263
      %v400 = vmul.f32 %v266, %v272
      %v401 = vmul.f32 %v267, %v273
      %v402 = vld [vmem:[%s243] sm:$0xff]
      %v403 = vadd.f32 %v400, %v401
      %v404 = vadd.f32 %v402, %v403
      %405 = vst [vmem:[%s243] sm:$0xff] %v404
      %v406 = vld [vmem:[%s243 + $0x8] sm:$0xff]
      %v407 = vadd.f32 %v266, %v267
      %v408 = vadd.f32 %v406, %v407
      %409 = vst [vmem:[%s243 + $0x8] sm:$0xff] %v408
      %v410 = vld [vmem:[%s243 + $0x10] sm:$0xff]
      %v411 = vadd.f32 %v272, %v273
      %v412 = vadd.f32 %v410, %v411
      %413 = vst [vmem:[%s243 + $0x10] sm:$0xff] %v412
      %v414 = vld [vmem:[%s243 + $0x18] sm:$0xff]
      %v415 = vadd.f32 %v398, %v399
      %v416 = vadd.f32 %v414, %v415
      %417 = vst [vmem:[%s243 + $0x18] sm:$0xff] %v416
      %v418 = vmul.f32 %v396, %v349
      %v419 = vmul.f32 %v397, %v361
      %v420 = vld [vmem:[%s243 + $0x20] sm:$0xff]
      %v421 = vadd.f32 %v418, %v419
      %v422 = vadd.f32 %v420, %v421
      %423 = vst [vmem:[%s243 + $0x20] sm:$0xff] %v422
      %v424 = vld [vmem:[%s243 + $0x28] sm:$0xff]
      %v425 = vadd.f32 %v396, %v397
      %v426 = vadd.f32 %v424, %v425
      %427 = vst [vmem:[%s243 + $0x28] sm:$0xff] %v426
      %v428 = vld [vmem:[%s243 + $0x30] sm:$0xff]
      %v429 = vadd.f32 %v394, %v395
      %v430 = vadd.f32 %v428, %v429
      %431 = vst [vmem:[%s243 + $0x30] sm:$0xff] %v430
      %p432 = scmp.lt.s32.totalorder %s18, 1
      %s433 = scalar_select %p432, %s18, 1
      %s434 = smul.addr %s433, 8
      %s435 = smul.addr %s434, 8
      %s436 = scalar_lea.vmem %s3, %s435
      // Predicated region
      $region37: #{isnet_loss.1} parent=31 // pred_check
        %p437 = pneg %p128
      $region38: #{isnet_loss.1} parent=31 // pred_check_branch
        %439 = sbr.rel (%p437) target = $region40
      $region39: #{isnet_loss.1} parent=31 // pred_region
        _
      $region40: #{isnet_loss.1} parent=31 // pred_fallthru
        _
    $region32: #{isnet_loss.1} parent=5 // pred_fallthru
      _
    %p440 = scmp.le.s32.totalorder 2, %s9
    // Predicated region
    $region41: #{isnet_loss.1} parent=5 // pred_check
      %p441 = pneg %p440
    $region42: #{isnet_loss.1} parent=5 // pred_check_branch
      %443 = sbr.rel (%p441) target = $region44
    $region43: #{isnet_loss.1} parent=5 // pred_region
      %s444 = ssub.s32 %s9, 2
      // Predicated region
      $region45: #{isnet_loss.1} parent=43 // pred_check
        %p445 = pneg %p134
      $region46: #{isnet_loss.1} parent=43 // pred_check_branch
        %447 = sbr.rel (%p445) target = $region48
      $region47: #{isnet_loss.1} parent=43 // pred_region
        %p448 = scmp.lt.s32.totalorder %s20, 1
        %s449 = scalar_select %p448, %s20, 1
        %s450 = smul.addr %s449, 8
        %s451 = smul.addr %s450, 8
        %s452 = scalar_lea.vmem %s3, %s451
      $region48: #{isnet_loss.1} parent=43 // pred_fallthru
        _
    $region44: #{isnet_loss.1} parent=5 // pred_fallthru
      _
  $region6: #{isnet_loss.1} parent=0 // loop_footer
    %s13 = sadd.s32 1, %s9
  $region7: #{isnet_loss.1} parent=0 // loop_footer_branch
    %8 = sbr.rel target = $region3
  $region8: #{isnet_loss.1} parent=0 // loop_exit
    _

</llo_original>
